<compile_context>
chip_gen: v7x
topology: tpu7x:2x2x1
jax: 0.10.0
libtpu: 0.0.40
codegen_flags: <defaults>
</compile_context>

<pallas_src>
import math

import jax
import jax.numpy as jnp
from jax.experimental import pallas as pl
from jax.experimental.pallas import tpu as pltpu


def _round_up(x: int, m: int) -> int:
    return -(-x // m) * m


def _pool_kernel(lens_ref, x_ref, o_ref):
    """One grid step pools Bt_g lane-groups of graphs at once.

    lens_ref: VMEM (Bt_g, 1, L) int32  -- valid node count, repeated per lane
    x_ref:    VMEM (Bt_g, Np, L)       -- packed node features
    o_ref:    VMEM (4, Bt_g, L) f32    -- [max, min, mean, std] over nodes
    """
    x = x_ref[...].astype(jnp.float32)                      # (Bt_g, Np, L)
    _, n_nodes, _ = x.shape

    n_lane = lens_ref[...]                                  # (Bt_g, 1, L) i32
    node_ids = jax.lax.broadcasted_iota(jnp.int32, (1, n_nodes, 1), 1)
    valid = node_ids < n_lane                               # (Bt_g, Np, L)

    # Scalar fill values (no materialized +/-inf tiles).
    x_max = jnp.max(jnp.where(valid, x, -jnp.inf), axis=1)  # (Bt_g, L)
    x_min = jnp.min(jnp.where(valid, x, jnp.inf), axis=1)   # (Bt_g, L)

    xm = jnp.where(valid, x, 0.0)
    nf = jnp.sum(valid.astype(jnp.float32), axis=1)         # (Bt_g, L) = n
    s = jnp.sum(xm, axis=1)                                 # (Bt_g, L)
    sq = jnp.sum(xm * xm, axis=1)                           # (Bt_g, L)

    mean = s / nf
    # torch.std default: unbiased (ddof=1). Fused one-pass form; clamp tiny
    # negative cancellation residue. n<=1 still yields NaN (matches torch);
    # zero-length padding graphs yield NaN/inf and are sliced away outside.
    var = jnp.maximum((sq - nf * mean * mean) / (nf - 1.0), 0.0)
    std = jnp.sqrt(var)

    # Four dense (Bt_g, L) stores (sublanes >= 8, lanes % 128 == 0).
    o_ref[0] = x_max.astype(o_ref.dtype)
    o_ref[1] = x_min.astype(o_ref.dtype)
    o_ref[2] = mean.astype(o_ref.dtype)
    o_ref[3] = std.astype(o_ref.dtype)


def _choose_block_groups(n_groups: int, n_nodes: int, lane_width: int,
                         vmem_budget_bytes: int = 8 * 1024 * 1024) -> int:
    """How many lane-groups to pool per grid step (double-buffered input)."""
    per_group_bytes = n_nodes * lane_width * 4
    bt = max(1, vmem_budget_bytes // per_group_bytes)
    bt = max(8, (bt // 8) * 8)                # >= 8 sublanes -> dense stores
    bt = min(bt, max(8, _round_up(n_groups, 8)))
    return bt


def _pack_graphs(graphs):
    """Pack a ragged list of (n_i, F) graphs into a lane-dense layout.

    Returns x_packed (NGp, Np, L) f32, lens_lane (NGp, 1, L) i32, metadata.
    G = 128/gcd(F,128) graphs share the lane axis so L = G*F is a multiple of
    128 with no per-feature padding.  x_packed may also be stored as bfloat16
    by the caller for a ~2x HBM saving; the kernel upcasts to f32 on load.
    """
    B = len(graphs)
    F = int(graphs[0].shape[1])
    sizes = [int(g.shape[0]) for g in graphs]
    N_max = max(sizes)

    G = 128 // math.gcd(F, 128)           # graphs folded into the lane axis
    L = G * F                             # multiple of 128
    Np = _round_up(N_max, 8)              # sublane multiple of 8

    n_groups = -(-B // G)
    Bt_g = _choose_block_groups(n_groups, Np, L)
    NGp = _round_up(n_groups, Bt_g)
    Bp = NGp * G

    x_packed = jnp.zeros((NGp, Np, L), dtype=jnp.float32)
    for b, g in enumerate(graphs):
        go, gi = b // G, b % G
        x_packed = x_packed.at[go, : g.shape[0], gi * F:(gi + 1) * F].set(
            g.astype(jnp.float32))

    lens = jnp.zeros((Bp,), dtype=jnp.int32)
    lens = lens.at[:B].set(jnp.array(sizes, dtype=jnp.int32))
    lens_lane = jnp.repeat(lens.reshape(NGp, G), F, axis=1).reshape(NGp, 1, L)

    return x_packed, lens_lane, (B, F, G, NGp, Np, L, Bt_g)


def functionals_pooling(graphs):
    """List of (n_i, F) node-feature arrays -> (B, 4, F) [max, min, mean, std]."""
    x_packed, lens_lane, (B, F, G, NGp, Np, L, Bt_g) = _pack_graphs(graphs)
    # TODO(synk): for graphs where Np*L*4 alone exceeds the VMEM budget, add a
    # node-split "arbitrary" grid axis with running max/min/sum/sumsq scratch.

    grid = (NGp // Bt_g,)
    in_bytes = NGp * Np * L * 4 + NGp * L * 4
    out_bytes = 4 * NGp * L * 4

    out = pl.pallas_call(
        _pool_kernel,
        out_shape=jax.ShapeDtypeStruct((4, NGp, L), jnp.float32),
        grid_spec=pltpu.PrefetchScalarGridSpec(
            num_scalar_prefetch=0,
            grid=grid,
            in_specs=[
                pl.BlockSpec((Bt_g, 1, L), lambda i: (i, 0, 0)),   # lens
                pl.BlockSpec((Bt_g, Np, L), lambda i: (i, 0, 0)),  # features
            ],
            out_specs=pl.BlockSpec((4, Bt_g, L), lambda i: (0, i, 0)),
        ),
        compiler_params=pltpu.CompilerParams(
            dimension_semantics=("parallel",),      # megacore / v7x 2 TCs
            vmem_limit_bytes=48 * 1024 * 1024,      # safe on v5e/v6e/v7x
        ),
        cost_estimate=pl.CostEstimate(
            flops=8 * NGp * Np * L,
            transcendentals=2 * NGp * L,
            bytes_accessed=in_bytes + out_bytes,
        ),
    )(lens_lane, x_packed)

    # Tiny output glue: (4, NGp, L) -> (B, 4, F).
    res = out.reshape(4, NGp, G, F).transpose(1, 2, 0, 3).reshape(NGp * G, 4, F)
    return res[:B]


def _reference(graphs):
    """Pure-JAX reference reproducing the PyTorch module on a list of graphs."""
    outs = []
    for g in graphs:
        g = g.astype(jnp.float32)
        outs.append(jnp.stack([
            jnp.max(g, axis=0),
            jnp.min(g, axis=0),
            jnp.mean(g, axis=0),
            jnp.std(g, axis=0, ddof=1),
        ]))
    return jnp.stack(outs)


if __name__ == "__main__":
    key = jax.random.PRNGKey(0)
    F = 32                          # feature dim
    sizes = [5, 8, 3, 8, 6, 2]      # ragged graph sizes (B = 6)
    keys = jax.random.split(key, len(sizes))
    graphs = [jax.random.normal(k, (n, F), dtype=jnp.float32)
              for k, n in zip(keys, sizes)]

    out = jax.block_until_ready(functionals_pooling(graphs))
    ref = _reference(graphs)

    assert out.shape == (len(sizes), 4, F), out.shape
    err = float(jnp.max(jnp.abs(out - ref)))
    assert jnp.allclose(out, ref, atol=1e-5, rtol=1e-5), err

    print("KERNEL_OK")
</pallas_src>

<mosaic_0001>
module attributes {stable_mosaic.version = 11 : i64} {
  func.func @_pool_kernel(%arg0: i32, %arg1: memref<8x1x128xi32, #tpu.memory_space<vmem>>, %arg2: memref<8x8x128xf32, #tpu.memory_space<vmem>>, %arg3: memref<4x8x128xf32, #tpu.memory_space<vmem>>) attributes {dimension_semantics = [#tpu.dimension_semantics<parallel>], iteration_bounds = array<i64: 1>, scalar_prefetch = 0 : i64, scratch_operands = 0 : i64, tpu.core_type = #tpu.core_type<tc>, window_params = [{transform_indices = @transform_0, window_bounds = array<i64: 8, 1, 128>}, {transform_indices = @transform_1, window_bounds = array<i64: 8, 8, 128>}, {transform_indices = @transform_2, window_bounds = array<i64: 4, 8, 128>}]} {
    %c0 = arith.constant 0 : index
    %c0_0 = arith.constant 0 : index
    %c0_1 = arith.constant 0 : index
    %0 = vector.load %arg2[%c0, %c0_0, %c0_1] : memref<8x8x128xf32, #tpu.memory_space<vmem>>, vector<8x8x128xf32>
    %c0_2 = arith.constant 0 : index
    %c0_3 = arith.constant 0 : index
    %c0_4 = arith.constant 0 : index
    %1 = vector.load %arg1[%c0_2, %c0_3, %c0_4] : memref<8x1x128xi32, #tpu.memory_space<vmem>>, vector<8x1x128xi32>
    %2 = tpu.iota {dimensions = array<i32: 1>} : vector<1x8x1xi32>
    %3 = vector.broadcast %2 : vector<1x8x1xi32> to vector<8x8x128xi32>
    %4 = vector.broadcast %1 : vector<8x1x128xi32> to vector<8x8x128xi32>
    %5 = arith.cmpi slt, %3, %4 : vector<8x8x128xi32>
    %cst = arith.constant 0xFF800000 : f32
    %6 = vector.broadcast %cst : f32 to vector<8x8x128xf32>
    %7 = arith.select %5, %0, %6 : vector<8x8x128xi1>, vector<8x8x128xf32>
    %cst_5 = arith.constant dense<0xFF800000> : vector<8x128xf32>
    %8 = vector.multi_reduction <maximumf>, %7, %cst_5 [1] : vector<8x8x128xf32> to vector<8x128xf32>
    %cst_6 = arith.constant 0x7F800000 : f32
    %9 = vector.broadcast %cst_6 : f32 to vector<8x8x128xf32>
    %10 = arith.select %5, %0, %9 : vector<8x8x128xi1>, vector<8x8x128xf32>
    %cst_7 = arith.constant dense<0x7F800000> : vector<8x128xf32>
    %11 = vector.multi_reduction <minimumf>, %10, %cst_7 [1] : vector<8x8x128xf32> to vector<8x128xf32>
    %cst_8 = arith.constant 0.000000e+00 : f32
    %12 = vector.broadcast %cst_8 : f32 to vector<8x8x128xf32>
    %13 = arith.select %5, %0, %12 : vector<8x8x128xi1>, vector<8x8x128xf32>
    %14 = arith.extui %5 : vector<8x8x128xi1> to vector<8x8x128xi32>
    %15 = arith.sitofp %14 : vector<8x8x128xi32> to vector<8x8x128xf32>
    %cst_9 = arith.constant dense<0.000000e+00> : vector<8x128xf32>
    %16 = vector.multi_reduction <add>, %15, %cst_9 [1] : vector<8x8x128xf32> to vector<8x128xf32>
    %cst_10 = arith.constant dense<0.000000e+00> : vector<8x128xf32>
    %17 = vector.multi_reduction <add>, %13, %cst_10 [1] : vector<8x8x128xf32> to vector<8x128xf32>
    %18 = arith.mulf %13, %13 : vector<8x8x128xf32>
    %cst_11 = arith.constant dense<0.000000e+00> : vector<8x128xf32>
    %19 = vector.multi_reduction <add>, %18, %cst_11 [1] : vector<8x8x128xf32> to vector<8x128xf32>
    %20 = arith.divf %17, %16 : vector<8x128xf32>
    %21 = arith.mulf %16, %20 : vector<8x128xf32>
    %22 = arith.mulf %21, %20 : vector<8x128xf32>
    %23 = arith.subf %19, %22 : vector<8x128xf32>
    %cst_12 = arith.constant 1.000000e+00 : f32
    %24 = vector.broadcast %cst_12 : f32 to vector<8x128xf32>
    %25 = arith.subf %16, %24 : vector<8x128xf32>
    %26 = arith.divf %23, %25 : vector<8x128xf32>
    %cst_13 = arith.constant 0.000000e+00 : f32
    %27 = vector.broadcast %cst_13 : f32 to vector<8x128xf32>
    %28 = arith.maximumf %26, %27 : vector<8x128xf32>
    %29 = math.sqrt %28 : vector<8x128xf32>
    %c0_14 = arith.constant 0 : index
    %c0_15 = arith.constant 0 : index
    %c0_16 = arith.constant 0 : index
    %30 = vector.load %arg3[%c0_14, %c0_15, %c0_16] : memref<4x8x128xf32, #tpu.memory_space<vmem>>, vector<1x8x128xf32>
    %31 = vector.shape_cast %30 : vector<1x8x128xf32> to vector<8x128xf32>
    %32 = vector.shape_cast %8 : vector<8x128xf32> to vector<1x8x128xf32>
    tpu.vector_store %arg3[%c0_14, %c0_15, %c0_16], %32 {strides = array<i32>} : memref<4x8x128xf32, #tpu.memory_space<vmem>>, vector<1x8x128xf32>,
    %c1 = arith.constant 1 : index
    %c0_17 = arith.constant 0 : index
    %c0_18 = arith.constant 0 : index
    %33 = vector.load %arg3[%c1, %c0_17, %c0_18] : memref<4x8x128xf32, #tpu.memory_space<vmem>>, vector<1x8x128xf32>
    %34 = vector.shape_cast %33 : vector<1x8x128xf32> to vector<8x128xf32>
    %35 = vector.shape_cast %11 : vector<8x128xf32> to vector<1x8x128xf32>
    tpu.vector_store %arg3[%c1, %c0_17, %c0_18], %35 {strides = array<i32>} : memref<4x8x128xf32, #tpu.memory_space<vmem>>, vector<1x8x128xf32>,
    %c2 = arith.constant 2 : index
    %c0_19 = arith.constant 0 : index
    %c0_20 = arith.constant 0 : index
    %36 = vector.load %arg3[%c2, %c0_19, %c0_20] : memref<4x8x128xf32, #tpu.memory_space<vmem>>, vector<1x8x128xf32>
    %37 = vector.shape_cast %36 : vector<1x8x128xf32> to vector<8x128xf32>
    %38 = vector.shape_cast %20 : vector<8x128xf32> to vector<1x8x128xf32>
    tpu.vector_store %arg3[%c2, %c0_19, %c0_20], %38 {strides = array<i32>} : memref<4x8x128xf32, #tpu.memory_space<vmem>>, vector<1x8x128xf32>,
    %c3 = arith.constant 3 : index
    %c0_21 = arith.constant 0 : index
    %c0_22 = arith.constant 0 : index
    %39 = vector.load %arg3[%c3, %c0_21, %c0_22] : memref<4x8x128xf32, #tpu.memory_space<vmem>>, vector<1x8x128xf32>
    %40 = vector.shape_cast %39 : vector<1x8x128xf32> to vector<8x128xf32>
    %41 = vector.shape_cast %29 : vector<8x128xf32> to vector<1x8x128xf32>
    tpu.vector_store %arg3[%c3, %c0_21, %c0_22], %41 {strides = array<i32>} : memref<4x8x128xf32, #tpu.memory_space<vmem>>, vector<1x8x128xf32>,
    return
  }
  func.func @transform_0(%arg0: i32) -> (i32, i32, i32) {
    %c0_i32 = arith.constant 0 : i32
    %c0_i32_0 = arith.constant 0 : i32
    %c0_i32_1 = arith.constant 0 : i32
    return %arg0, %c0_i32, %c0_i32_0 : i32, i32, i32
  }
  func.func @transform_1(%arg0: i32) -> (i32, i32, i32) {
    %c0_i32 = arith.constant 0 : i32
    %c0_i32_0 = arith.constant 0 : i32
    %c0_i32_1 = arith.constant 0 : i32
    return %arg0, %c0_i32, %c0_i32_0 : i32, i32, i32
  }
  func.func @transform_2(%arg0: i32) -> (i32, i32, i32) {
    %c0_i32 = arith.constant 0 : i32
    %c0_i32_0 = arith.constant 0 : i32
    %c0_i32_1 = arith.constant 0 : i32
    return %c0_i32, %arg0, %c0_i32_0 : i32, i32, i32
  }
}

</mosaic_0001>

<llo_original>
// kernel: tpu_custom_call.1
$region0: #{tpu_custom_call.1}
  #allocation0 [shape = 'u32[]', space=smem, size = 0x4, offset = 0x4, fixed_abs, tag = 'smem constant byte address 0x4 - core index']
  #allocation1 [shape = 'u32[144,128]{1,0:T(1,128)}', space=vmem, size = 0x12000, scoped, tag = 'internal scratch']
  %s0 = inlined_call_operand.hbm [shape: s32[8,1,128], index: 0, kind: input, shape index: {}]
  %s1 = inlined_call_operand.hbm [shape: f32[8,8,128], index: 1, kind: input, shape index: {}]
  %s2 = inlined_call_operand.hbm [shape: f32[4,8,128], index: 2, kind: output, shape index: {}]
  %s3 = sld [smem:[#allocation0]]
  $region26: #{tpu_custom_call.1} parent=0
    _
  %s5 = ssub.s32 1, %s3
  %s6 = scalar_select 0, %s5, %s3
  $region1: #{tpu_custom_call.1} parent=0
    #allocation2 [shape = 'u8[4096]{0}', space=vmem, size = 0x1000, scoped, tag = 'input window, operand 0, single buffered']
    #allocation3 [shape = 's32[1]{0}', space=sflag, size = 0x4, scoped, tag = 'scoped memory for tpu_custom_call.1']
    #allocation4 [shape = 's32[1]{0}', space=sflag, size = 0x4, scoped, tag = 'scoped memory for tpu_custom_call.1']
    #allocation5 [shape = 'u8[32768]{0}', space=vmem, size = 0x8000, scoped, tag = 'input window, operand 1, single buffered']
    #allocation6 [shape = 's32[1]{0}', space=sflag, size = 0x4, scoped, tag = 'scoped memory for tpu_custom_call.1']
    #allocation7 [shape = 'u8[16384]{0}', space=vmem, size = 0x4000, scoped, tag = 'output window, operand 0, single buffered']
    %7 = vsyncpa [#allocation3], 0
    %8 = vsyncpa [#allocation6], 0
    %9 = vsyncpa [#allocation4], 0
    // Predicated region
    $region2: #{tpu_custom_call.1} parent=1 // pred_check
      _
    $region3: #{tpu_custom_call.1} parent=1 // pred_check_branch
      %11 = sbr.rel (0) target = $region5
    $region4: #{tpu_custom_call.1} parent=1 // pred_region
      %s13 = ssub.s32 128, 128
      %14 = vsyncadd [#allocation3], %s13
      %s15 = sshll.u32 [#allocation2], 4
      %s16 = int_to_ptr.vmem [resolvable:$true] %s15
      %21 = dma.hbm_to_vmem [thread:$0]  %s0, 128, %s16, [#allocation3], 16, 16, 1
    $region5: #{tpu_custom_call.1} parent=1 // pred_fallthru
      _
    // Predicated region
    $region6: #{tpu_custom_call.1} parent=1 // pred_check
      _
    $region7: #{tpu_custom_call.1} parent=1 // pred_check_branch
      %23 = sbr.rel (0) target = $region9
    $region8: #{tpu_custom_call.1} parent=1 // pred_region
      %s25 = ssub.s32 1024, 1024
      %26 = vsyncadd [#allocation6], %s25
      %s27 = sshll.u32 [#allocation5], 4
      %s28 = int_to_ptr.vmem [resolvable:$true] %s27
      %33 = dma.hbm_to_vmem [thread:$0]  %s1, 1024, %s28, [#allocation6], 128, 128, 8
    $region9: #{tpu_custom_call.1} parent=1 // pred_fallthru
      _
    // Predicated region
    $region10: #{tpu_custom_call.1} parent=1 // pred_check
      _
    $region11: #{tpu_custom_call.1} parent=1 // pred_check_branch
      %35 = sbr.rel (0) target = $region13
    $region12: #{tpu_custom_call.1} parent=1 // pred_region
      %36 = dma.done [#allocation3], 128
    $region13: #{tpu_custom_call.1} parent=1 // pred_fallthru
      _
    // Predicated region
    $region14: #{tpu_custom_call.1} parent=1 // pred_check
      _
    $region15: #{tpu_custom_call.1} parent=1 // pred_check_branch
      %38 = sbr.rel (0) target = $region17
    $region16: #{tpu_custom_call.1} parent=1 // pred_region
      %39 = dma.done [#allocation6], 1024
    $region17: #{tpu_custom_call.1} parent=1 // pred_fallthru
      _
    %v40 = vld [vmem:[#allocation5] sm:$0xff]
    %v41 = vld [vmem:[#allocation5 + $0x8] sm:$0xff]
    %v42 = vld [vmem:[#allocation5 + $0x10] sm:$0xff]
    %v43 = vld [vmem:[#allocation5 + $0x18] sm:$0xff]
    %v44 = vld [vmem:[#allocation5 + $0x20] sm:$0xff]
    %v45 = vld [vmem:[#allocation5 + $0x28] sm:$0xff]
    %v46 = vld [vmem:[#allocation5 + $0x30] sm:$0xff]
    %v47 = vld [vmem:[#allocation5 + $0x38] sm:$0xff]
    %v48 = vld [vmem:[#allocation2] sm:$0x1]
    %v49 = vld [vmem:[#allocation2 + $0x1] sm:$0x1]
    %v50 = vld [vmem:[#allocation2 + $0x2] sm:$0x1]
    %v51 = vld [vmem:[#allocation2 + $0x3] sm:$0x1]
    %v52 = vld [vmem:[#allocation2 + $0x4] sm:$0x1]
    %v53 = vld [vmem:[#allocation2 + $0x5] sm:$0x1]
    %v54 = vld [vmem:[#allocation2 + $0x6] sm:$0x1]
    %v55 = vld [vmem:[#allocation2 + $0x7] sm:$0x1]
    %v56 = vlaneseq
    %v57 = vshrl.u32 %v56, 7
    %v58 = vlaneseq
    %v59 = vshrl.u32 %v58, 7
    %v60 = vsub.s32 0, %v59
    %v61 = vrot.slane %v48, %v60
    %v62 = vlaneseq
    %v63 = vshrl.u32 %v62, 7
    %v64 = vsub.s32 0, %v63
    %v65 = vrot.slane %v49, %v64
    %v66 = vlaneseq
    %v67 = vshrl.u32 %v66, 7
    %v68 = vsub.s32 0, %v67
    %v69 = vrot.slane %v50, %v68
    %v70 = vlaneseq
    %v71 = vshrl.u32 %v70, 7
    %v72 = vsub.s32 0, %v71
    %v73 = vrot.slane %v51, %v72
    %v74 = vlaneseq
    %v75 = vshrl.u32 %v74, 7
    %v76 = vsub.s32 0, %v75
    %v77 = vrot.slane %v52, %v76
    %v78 = vlaneseq
    %v79 = vshrl.u32 %v78, 7
    %v80 = vsub.s32 0, %v79
    %v81 = vrot.slane %v53, %v80
    %v82 = vlaneseq
    %v83 = vshrl.u32 %v82, 7
    %v84 = vsub.s32 0, %v83
    %v85 = vrot.slane %v54, %v84
    %v86 = vlaneseq
    %v87 = vshrl.u32 %v86, 7
    %v88 = vsub.s32 0, %v87
    %v89 = vrot.slane %v55, %v88
    %vm90 = vcmp.lt.s32.totalorder %v57, %v61
    %vm91 = vcmp.lt.s32.totalorder %v57, %v65
    %vm92 = vcmp.lt.s32.totalorder %v57, %v69
    %vm93 = vcmp.lt.s32.totalorder %v57, %v73
    %vm94 = vcmp.lt.s32.totalorder %v57, %v77
    %vm95 = vcmp.lt.s32.totalorder %v57, %v81
    %vm96 = vcmp.lt.s32.totalorder %v57, %v85
    %vm97 = vcmp.lt.s32.totalorder %v57, %v89
    %v98 = vsel %vm90, %v40, -inf
    %v99 = vsel %vm91, %v41, -inf
    %v100 = vsel %vm92, %v42, -inf
    %v101 = vsel %vm93, %v43, -inf
    %v102 = vsel %vm94, %v44, -inf
    %v103 = vsel %vm95, %v45, -inf
    %v104 = vsel %vm96, %v46, -inf
    %v105 = vsel %vm97, %v47, -inf
    %v106 = vrot.slane %v98, 4
    %v107 = vmax.f32 %v98, %v106
    %v108 = vrot.slane %v107, 2
    %v109 = vmax.f32 %v107, %v108
    %v110 = vrot.slane %v109, 1
    %v111 = vmax.f32 %v109, %v110
    %v112 = vrot.slane %v99, 4
    %v113 = vmax.f32 %v99, %v112
    %v114 = vrot.slane %v113, 2
    %v115 = vmax.f32 %v113, %v114
    %v116 = vrot.slane %v115, 1
    %v117 = vmax.f32 %v115, %v116
    %v118 = vrot.slane %v100, 4
    %v119 = vmax.f32 %v100, %v118
    %v120 = vrot.slane %v119, 2
    %v121 = vmax.f32 %v119, %v120
    %v122 = vrot.slane %v121, 1
    %v123 = vmax.f32 %v121, %v122
    %v124 = vrot.slane %v101, 4
    %v125 = vmax.f32 %v101, %v124
    %v126 = vrot.slane %v125, 2
    %v127 = vmax.f32 %v125, %v126
    %v128 = vrot.slane %v127, 1
    %v129 = vmax.f32 %v127, %v128
    %v130 = vrot.slane %v102, 4
    %v131 = vmax.f32 %v102, %v130
    %v132 = vrot.slane %v131, 2
    %v133 = vmax.f32 %v131, %v132
    %v134 = vrot.slane %v133, 1
    %v135 = vmax.f32 %v133, %v134
    %v136 = vrot.slane %v103, 4
    %v137 = vmax.f32 %v103, %v136
    %v138 = vrot.slane %v137, 2
    %v139 = vmax.f32 %v137, %v138
    %v140 = vrot.slane %v139, 1
    %v141 = vmax.f32 %v139, %v140
    %v142 = vrot.slane %v104, 4
    %v143 = vmax.f32 %v104, %v142
    %v144 = vrot.slane %v143, 2
    %v145 = vmax.f32 %v143, %v144
    %v146 = vrot.slane %v145, 1
    %v147 = vmax.f32 %v145, %v146
    %v148 = vrot.slane %v105, 4
    %v149 = vmax.f32 %v105, %v148
    %v150 = vrot.slane %v149, 2
    %v151 = vmax.f32 %v149, %v150
    %v152 = vrot.slane %v151, 1
    %v153 = vmax.f32 %v151, %v152
    %v154 = vsel %vm90, %v40, inf
    %v155 = vsel %vm91, %v41, inf
    %v156 = vsel %vm92, %v42, inf
    %v157 = vsel %vm93, %v43, inf
    %v158 = vsel %vm94, %v44, inf
    %v159 = vsel %vm95, %v45, inf
    %v160 = vsel %vm96, %v46, inf
    %v161 = vsel %vm97, %v47, inf
    %v162 = vrot.slane %v154, 4
    %v163 = vmin.f32 %v154, %v162
    %v164 = vrot.slane %v163, 2
    %v165 = vmin.f32 %v163, %v164
    %v166 = vrot.slane %v165, 1
    %v167 = vmin.f32 %v165, %v166
    %v168 = vrot.slane %v155, 4
    %v169 = vmin.f32 %v155, %v168
    %v170 = vrot.slane %v169, 2
    %v171 = vmin.f32 %v169, %v170
    %v172 = vrot.slane %v171, 1
    %v173 = vmin.f32 %v171, %v172
    %v174 = vrot.slane %v156, 4
    %v175 = vmin.f32 %v156, %v174
    %v176 = vrot.slane %v175, 2
    %v177 = vmin.f32 %v175, %v176
    %v178 = vrot.slane %v177, 1
    %v179 = vmin.f32 %v177, %v178
    %v180 = vrot.slane %v157, 4
    %v181 = vmin.f32 %v157, %v180
    %v182 = vrot.slane %v181, 2
    %v183 = vmin.f32 %v181, %v182
    %v184 = vrot.slane %v183, 1
    %v185 = vmin.f32 %v183, %v184
    %v186 = vrot.slane %v158, 4
    %v187 = vmin.f32 %v158, %v186
    %v188 = vrot.slane %v187, 2
    %v189 = vmin.f32 %v187, %v188
    %v190 = vrot.slane %v189, 1
    %v191 = vmin.f32 %v189, %v190
    %v192 = vrot.slane %v159, 4
    %v193 = vmin.f32 %v159, %v192
    %v194 = vrot.slane %v193, 2
    %v195 = vmin.f32 %v193, %v194
    %v196 = vrot.slane %v195, 1
    %v197 = vmin.f32 %v195, %v196
    %v198 = vrot.slane %v160, 4
    %v199 = vmin.f32 %v160, %v198
    %v200 = vrot.slane %v199, 2
    %v201 = vmin.f32 %v199, %v200
    %v202 = vrot.slane %v201, 1
    %v203 = vmin.f32 %v201, %v202
    %v204 = vrot.slane %v161, 4
    %v205 = vmin.f32 %v161, %v204
    %v206 = vrot.slane %v205, 2
    %v207 = vmin.f32 %v205, %v206
    %v208 = vrot.slane %v207, 1
    %v209 = vmin.f32 %v207, %v208
    %v210 = vsel %vm90, %v40, 0.0
    %v211 = vsel %vm91, %v41, 0.0
    %v212 = vsel %vm92, %v42, 0.0
    %v213 = vsel %vm93, %v43, 0.0
    %v214 = vsel %vm94, %v44, 0.0
    %v215 = vsel %vm95, %v45, 0.0
    %v216 = vsel %vm96, %v46, 0.0
    %v217 = vsel %vm97, %v47, 0.0
    %v218 = vsel %vm90, 1, 0
    %v219 = vsel %vm91, 1, 0
    %v220 = vsel %vm92, 1, 0
    %v221 = vsel %vm93, 1, 0
    %v222 = vsel %vm94, 1, 0
    %v223 = vsel %vm95, 1, 0
    %v224 = vsel %vm96, 1, 0
    %v225 = vsel %vm97, 1, 0
    %v226 = vcvt.s32.f32 %v218
    %v227 = vcvt.s32.f32 %v219
    %v228 = vcvt.s32.f32 %v220
    %v229 = vcvt.s32.f32 %v221
    %v230 = vcvt.s32.f32 %v222
    %v231 = vcvt.s32.f32 %v223
    %v232 = vcvt.s32.f32 %v224
    %v233 = vcvt.s32.f32 %v225
    %v234 = vrot.slane %v226, 4
    %v235 = vadd.f32 %v226, %v234
    %v236 = vrot.slane %v235, 2
    %v237 = vadd.f32 %v235, %v236
    %v238 = vrot.slane %v237, 1
    %v239 = vadd.f32 %v237, %v238
    %v240 = vrot.slane %v227, 4
    %v241 = vadd.f32 %v227, %v240
    %v242 = vrot.slane %v241, 2
    %v243 = vadd.f32 %v241, %v242
    %v244 = vrot.slane %v243, 1
    %v245 = vadd.f32 %v243, %v244
    %v246 = vrot.slane %v228, 4
    %v247 = vadd.f32 %v228, %v246
    %v248 = vrot.slane %v247, 2
    %v249 = vadd.f32 %v247, %v248
    %v250 = vrot.slane %v249, 1
    %v251 = vadd.f32 %v249, %v250
    %v252 = vrot.slane %v229, 4
    %v253 = vadd.f32 %v229, %v252
    %v254 = vrot.slane %v253, 2
    %v255 = vadd.f32 %v253, %v254
    %v256 = vrot.slane %v255, 1
    %v257 = vadd.f32 %v255, %v256
    %v258 = vrot.slane %v230, 4
    %v259 = vadd.f32 %v230, %v258
    %v260 = vrot.slane %v259, 2
    %v261 = vadd.f32 %v259, %v260
    %v262 = vrot.slane %v261, 1
    %v263 = vadd.f32 %v261, %v262
    %v264 = vrot.slane %v231, 4
    %v265 = vadd.f32 %v231, %v264
    %v266 = vrot.slane %v265, 2
    %v267 = vadd.f32 %v265, %v266
    %v268 = vrot.slane %v267, 1
    %v269 = vadd.f32 %v267, %v268
    %v270 = vrot.slane %v232, 4
    %v271 = vadd.f32 %v232, %v270
    %v272 = vrot.slane %v271, 2
    %v273 = vadd.f32 %v271, %v272
    %v274 = vrot.slane %v273, 1
    %v275 = vadd.f32 %v273, %v274
    %v276 = vrot.slane %v233, 4
    %v277 = vadd.f32 %v233, %v276
    %v278 = vrot.slane %v277, 2
    %v279 = vadd.f32 %v277, %v278
    %v280 = vrot.slane %v279, 1
    %v281 = vadd.f32 %v279, %v280
    %v282 = vrot.slane %v210, 4
    %v283 = vadd.f32 %v210, %v282
    %v284 = vrot.slane %v283, 2
    %v285 = vadd.f32 %v283, %v284
    %v286 = vrot.slane %v285, 1
    %v287 = vadd.f32 %v285, %v286
    %v288 = vrot.slane %v211, 4
    %v289 = vadd.f32 %v211, %v288
    %v290 = vrot.slane %v289, 2
    %v291 = vadd.f32 %v289, %v290
    %v292 = vrot.slane %v291, 1
    %v293 = vadd.f32 %v291, %v292
    %v294 = vrot.slane %v212, 4
    %v295 = vadd.f32 %v212, %v294
    %v296 = vrot.slane %v295, 2
    %v297 = vadd.f32 %v295, %v296
    %v298 = vrot.slane %v297, 1
    %v299 = vadd.f32 %v297, %v298
    %v300 = vrot.slane %v213, 4
    %v301 = vadd.f32 %v213, %v300
    %v302 = vrot.slane %v301, 2
    %v303 = vadd.f32 %v301, %v302
    %v304 = vrot.slane %v303, 1
    %v305 = vadd.f32 %v303, %v304
    %v306 = vrot.slane %v214, 4
    %v307 = vadd.f32 %v214, %v306
    %v308 = vrot.slane %v307, 2
    %v309 = vadd.f32 %v307, %v308
    %v310 = vrot.slane %v309, 1
    %v311 = vadd.f32 %v309, %v310
    %v312 = vrot.slane %v215, 4
    %v313 = vadd.f32 %v215, %v312
    %v314 = vrot.slane %v313, 2
    %v315 = vadd.f32 %v313, %v314
    %v316 = vrot.slane %v315, 1
    %v317 = vadd.f32 %v315, %v316
    %v318 = vrot.slane %v216, 4
    %v319 = vadd.f32 %v216, %v318
    %v320 = vrot.slane %v319, 2
    %v321 = vadd.f32 %v319, %v320
    %v322 = vrot.slane %v321, 1
    %v323 = vadd.f32 %v321, %v322
    %v324 = vrot.slane %v217, 4
    %v325 = vadd.f32 %v217, %v324
    %v326 = vrot.slane %v325, 2
    %v327 = vadd.f32 %v325, %v326
    %v328 = vrot.slane %v327, 1
    %v329 = vadd.f32 %v327, %v328
    %v330 = vmul.f32 %v210, %v210
    %v331 = vmul.f32 %v211, %v211
    %v332 = vmul.f32 %v212, %v212
    %v333 = vmul.f32 %v213, %v213
    %v334 = vmul.f32 %v214, %v214
    %v335 = vmul.f32 %v215, %v215
    %v336 = vmul.f32 %v216, %v216
    %v337 = vmul.f32 %v217, %v217
    %v338 = vrot.slane %v330, 4
    %v339 = vadd.f32 %v330, %v338
    %v340 = vrot.slane %v339, 2
    %v341 = vadd.f32 %v339, %v340
    %v342 = vrot.slane %v341, 1
    %v343 = vadd.f32 %v341, %v342
    %v344 = vrot.slane %v331, 4
    %v345 = vadd.f32 %v331, %v344
    %v346 = vrot.slane %v345, 2
    %v347 = vadd.f32 %v345, %v346
    %v348 = vrot.slane %v347, 1
    %v349 = vadd.f32 %v347, %v348
    %v350 = vrot.slane %v332, 4
    %v351 = vadd.f32 %v332, %v350
    %v352 = vrot.slane %v351, 2
    %v353 = vadd.f32 %v351, %v352
    %v354 = vrot.slane %v353, 1
    %v355 = vadd.f32 %v353, %v354
    %v356 = vrot.slane %v333, 4
    %v357 = vadd.f32 %v333, %v356
    %v358 = vrot.slane %v357, 2
    %v359 = vadd.f32 %v357, %v358
    %v360 = vrot.slane %v359, 1
    %v361 = vadd.f32 %v359, %v360
    %v362 = vrot.slane %v334, 4
    %v363 = vadd.f32 %v334, %v362
    %v364 = vrot.slane %v363, 2
    %v365 = vadd.f32 %v363, %v364
    %v366 = vrot.slane %v365, 1
    %v367 = vadd.f32 %v365, %v366
    %v368 = vrot.slane %v335, 4
    %v369 = vadd.f32 %v335, %v368
    %v370 = vrot.slane %v369, 2
    %v371 = vadd.f32 %v369, %v370
    %v372 = vrot.slane %v371, 1
    %v373 = vadd.f32 %v371, %v372
    %v374 = vrot.slane %v336, 4
    %v375 = vadd.f32 %v336, %v374
    %v376 = vrot.slane %v375, 2
    %v377 = vadd.f32 %v375, %v376
    %v378 = vrot.slane %v377, 1
    %v379 = vadd.f32 %v377, %v378
    %v380 = vrot.slane %v337, 4
    %v381 = vadd.f32 %v337, %v380
    %v382 = vrot.slane %v381, 2
    %v383 = vadd.f32 %v381, %v382
    %v384 = vrot.slane %v383, 1
    %v385 = vadd.f32 %v383, %v384
    %v386 = vrcp.pop %v239
    %v387 = vmul.f32 %v287, %v386
    %v388 = vrcp.pop %v245
    %v389 = vmul.f32 %v293, %v388
    %v390 = vrcp.pop %v251
    %v391 = vmul.f32 %v299, %v390
    %v392 = vrcp.pop %v257
    %v393 = vmul.f32 %v305, %v392
    %v394 = vrcp.pop %v263
    %v395 = vmul.f32 %v311, %v394
    %v396 = vrcp.pop %v269
    %v397 = vmul.f32 %v317, %v396
    %v398 = vrcp.pop %v275
    %v399 = vmul.f32 %v323, %v398
    %v400 = vrcp.pop %v281
    %v401 = vmul.f32 %v329, %v400
    %v402 = vmul.f32 %v239, %v387
    %v403 = vmul.f32 %v245, %v389
    %v404 = vmul.f32 %v251, %v391
    %v405 = vmul.f32 %v257, %v393
    %v406 = vmul.f32 %v263, %v395
    %v407 = vmul.f32 %v269, %v397
    %v408 = vmul.f32 %v275, %v399
    %v409 = vmul.f32 %v281, %v401
    %v410 = vmul.f32 %v402, %v387
    %v411 = vmul.f32 %v403, %v389
    %v412 = vmul.f32 %v404, %v391
    %v413 = vmul.f32 %v405, %v393
    %v414 = vmul.f32 %v406, %v395
    %v415 = vmul.f32 %v407, %v397
    %v416 = vmul.f32 %v408, %v399
    %v417 = vmul.f32 %v409, %v401
    %v418 = vsub.f32 %v343, %v410
    %v419 = vsub.f32 %v349, %v411
    %v420 = vsub.f32 %v355, %v412
    %v421 = vsub.f32 %v361, %v413
    %v422 = vsub.f32 %v367, %v414
    %v423 = vsub.f32 %v373, %v415
    %v424 = vsub.f32 %v379, %v416
    %v425 = vsub.f32 %v385, %v417
    %v426 = vsub.f32 %v239, 1.0
    %v427 = vsub.f32 %v245, 1.0
    %v428 = vsub.f32 %v251, 1.0
    %v429 = vsub.f32 %v257, 1.0
    %v430 = vsub.f32 %v263, 1.0
    %v431 = vsub.f32 %v269, 1.0
    %v432 = vsub.f32 %v275, 1.0
    %v433 = vsub.f32 %v281, 1.0
    %v434 = vrcp.pop %v426
    %v435 = vmul.f32 %v418, %v434
    %v436 = vrcp.pop %v427
    %v437 = vmul.f32 %v419, %v436
    %v438 = vrcp.pop %v428
    %v439 = vmul.f32 %v420, %v438
    %v440 = vrcp.pop %v429
    %v441 = vmul.f32 %v421, %v440
    %v442 = vrcp.pop %v430
    %v443 = vmul.f32 %v422, %v442
    %v444 = vrcp.pop %v431
    %v445 = vmul.f32 %v423, %v444
    %v446 = vrcp.pop %v432
    %v447 = vmul.f32 %v424, %v446
    %v448 = vrcp.pop %v433
    %v449 = vmul.f32 %v425, %v448
    %v450 = vmax.f32 %v435, 0.0
    %v451 = vmax.f32 %v437, 0.0
    %v452 = vmax.f32 %v439, 0.0
    %v453 = vmax.f32 %v441, 0.0
    %v454 = vmax.f32 %v443, 0.0
    %v455 = vmax.f32 %v445, 0.0
    %v456 = vmax.f32 %v447, 0.0
    %v457 = vmax.f32 %v449, 0.0
    %v458 = vrsqrt.pop %v450
    %v459 = vmul.f32 %v450, %v458
    %vm460 = vcmp.eq.f32.partialorder %v450, inf
    %v461 = vsel %vm460, %v450, %v459
    %vm462 = vcmp.eq.f32.partialorder %v450, 0.0
    %v463 = vand.u32 %v450, 2147483648
    %v464 = vsel %vm462, %v463, %v461
    %v465 = vrsqrt.pop %v451
    %v466 = vmul.f32 %v451, %v465
    %vm467 = vcmp.eq.f32.partialorder %v451, inf
    %v468 = vsel %vm467, %v451, %v466
    %vm469 = vcmp.eq.f32.partialorder %v451, 0.0
    %v470 = vand.u32 %v451, 2147483648
    %v471 = vsel %vm469, %v470, %v468
    %v472 = vrsqrt.pop %v452
    %v473 = vmul.f32 %v452, %v472
    %vm474 = vcmp.eq.f32.partialorder %v452, inf
    %v475 = vsel %vm474, %v452, %v473
    %vm476 = vcmp.eq.f32.partialorder %v452, 0.0
    %v477 = vand.u32 %v452, 2147483648
    %v478 = vsel %vm476, %v477, %v475
    %v479 = vrsqrt.pop %v453
    %v480 = vmul.f32 %v453, %v479
    %vm481 = vcmp.eq.f32.partialorder %v453, inf
    %v482 = vsel %vm481, %v453, %v480
    %vm483 = vcmp.eq.f32.partialorder %v453, 0.0
    %v484 = vand.u32 %v453, 2147483648
    %v485 = vsel %vm483, %v484, %v482
    %v486 = vrsqrt.pop %v454
    %v487 = vmul.f32 %v454, %v486
    %vm488 = vcmp.eq.f32.partialorder %v454, inf
    %v489 = vsel %vm488, %v454, %v487
    %vm490 = vcmp.eq.f32.partialorder %v454, 0.0
    %v491 = vand.u32 %v454, 2147483648
    %v492 = vsel %vm490, %v491, %v489
    %v493 = vrsqrt.pop %v455
    %v494 = vmul.f32 %v455, %v493
    %vm495 = vcmp.eq.f32.partialorder %v455, inf
    %v496 = vsel %vm495, %v455, %v494
    %vm497 = vcmp.eq.f32.partialorder %v455, 0.0
    %v498 = vand.u32 %v455, 2147483648
    %v499 = vsel %vm497, %v498, %v496
    %v500 = vrsqrt.pop %v456
    %v501 = vmul.f32 %v456, %v500
    %vm502 = vcmp.eq.f32.partialorder %v456, inf
    %v503 = vsel %vm502, %v456, %v501
    %vm504 = vcmp.eq.f32.partialorder %v456, 0.0
    %v505 = vand.u32 %v456, 2147483648
    %v506 = vsel %vm504, %v505, %v503
    %v507 = vrsqrt.pop %v457
    %v508 = vmul.f32 %v457, %v507
    %vm509 = vcmp.eq.f32.partialorder %v457, inf
    %v510 = vsel %vm509, %v457, %v508
    %vm511 = vcmp.eq.f32.partialorder %v457, 0.0
    %v512 = vand.u32 %v457, 2147483648
    %v513 = vsel %vm511, %v512, %v510
    %vm522 = vcmask 1041409
    %v523 = vsel %vm522, %v117, %v111
    %vm524 = vcmask 1042434
    %v525 = vsel %vm524, %v123, %v523
    %vm526 = vcmask 1043459
    %v527 = vsel %vm526, %v129, %v525
    %vm528 = vcmask 1044484
    %v529 = vsel %vm528, %v135, %v527
    %vm530 = vcmask 1045509
    %v531 = vsel %vm530, %v141, %v529
    %vm532 = vcmask 1046534
    %v533 = vsel %vm532, %v147, %v531
    %vm534 = vcmask 1047559
    %v535 = vsel %vm534, %v153, %v533
    %537 = vst [vmem:[#allocation7] sm:$0xff] %v535
    %v546 = vsel %vm522, %v173, %v167
    %v547 = vsel %vm524, %v179, %v546
    %v548 = vsel %vm526, %v185, %v547
    %v549 = vsel %vm528, %v191, %v548
    %v550 = vsel %vm530, %v197, %v549
    %v551 = vsel %vm532, %v203, %v550
    %v552 = vsel %vm534, %v209, %v551
    %s554 = scalar_lea.vmem [#allocation7], 8
    %555 = vst [vmem:[%s554] sm:$0xff] %v552
    %v564 = vsel %vm522, %v389, %v387
    %v565 = vsel %vm524, %v391, %v564
    %v566 = vsel %vm526, %v393, %v565
    %v567 = vsel %vm528, %v395, %v566
    %v568 = vsel %vm530, %v397, %v567
    %v569 = vsel %vm532, %v399, %v568
    %v570 = vsel %vm534, %v401, %v569
    %s572 = scalar_lea.vmem [#allocation7], 16
    %573 = vst [vmem:[%s572] sm:$0xff] %v570
    %v582 = vsel %vm522, %v471, %v464
    %v583 = vsel %vm524, %v478, %v582
    %v584 = vsel %vm526, %v485, %v583
    %v585 = vsel %vm528, %v492, %v584
    %v586 = vsel %vm530, %v499, %v585
    %v587 = vsel %vm532, %v506, %v586
    %v588 = vsel %vm534, %v513, %v587
    %s590 = scalar_lea.vmem [#allocation7], 24
    %591 = vst [vmem:[%s590] sm:$0xff] %v588
    // Predicated region
    $region18: #{tpu_custom_call.1} parent=1 // pred_check
      _
    $region19: #{tpu_custom_call.1} parent=1 // pred_check_branch
      %593 = sbr.rel (0) target = $region21
    $region20: #{tpu_custom_call.1} parent=1 // pred_region
      %s595 = ssub.s32 512, 512
      %596 = vsyncadd [#allocation4], %s595
      %s597 = sshll.u32 [#allocation7], 4
      %s598 = int_to_ptr.vmem [resolvable:$true] %s597
      %603 = dma.vmem_to_hbm [thread:$0]  %s598, 512, %s2, [#allocation4], 128, 128, 8
    $region21: #{tpu_custom_call.1} parent=1 // pred_fallthru
      _
    // Predicated region
    $region22: #{tpu_custom_call.1} parent=1 // pred_check
      _
    $region23: #{tpu_custom_call.1} parent=1 // pred_check_branch
      %605 = sbr.rel (0) target = $region25
    $region24: #{tpu_custom_call.1} parent=1 // pred_region
      %606 = dma.done [#allocation4], 512
    $region25: #{tpu_custom_call.1} parent=1 // pred_fallthru
      _
    %607 = vsyncpa [#allocation3], 1
    %608 = vsyncpa [#allocation6], 1
    %609 = vsyncpa [#allocation4], 1

</llo_original>
